<compile_context>
chip_gen: v7x
topology: tpu7x:2x2x1
jax: 0.10.0
libtpu: 0.0.40
codegen_flags: <defaults>
</compile_context>

<pallas_src>
import jax
import jax.numpy as jnp
from jax.experimental import pallas as pl
from jax.experimental.pallas import tpu as pltpu

_LANE = 128
# Conservative per-call VMEM budget for the double-buffered tiles + resident
# weight/scale/shift.  Well below the default scoped VMEM limit on every
# generation (v5e: 16 MiB, v6e: 32 MiB, v7x: 32 MiB scoped / 64 MiB physical),
# so no vmem_limit_bytes override is needed.
_VMEM_TILE_BUDGET = 8 * 1024 * 1024
# If the full (in + out) slab is at most this many bytes, run a single grid
# step with everything resident (latency-bound regime).
_SINGLE_STEP_BYTES = 2 * 1024 * 1024
_MAX_UNROLL_BATCH = 8


def _conv_bn_relu_tile_kernel(w_ref, scale_ref, shift_ref, x_ref, o_ref):
    """One (C, T) spatial tile of one batch: relu((W @ x) * scale + shift)."""
    acc = jnp.dot(w_ref[...], x_ref[...],
                  preferred_element_type=jnp.float32)        # MXU (C, T)
    acc = acc * scale_ref[...] + shift_ref[...]              # folded BN, f32 epilogue
    o_ref[...] = jnp.maximum(acc, 0.0).astype(o_ref.dtype)   # ReLU + cast


def _conv_bn_relu_single_kernel(w_ref, scale_ref, shift_ref, x_ref, o_ref):
    """Whole problem in one grid step; static unroll over a small batch."""
    w = w_ref[...]
    scale = scale_ref[...]
    shift = shift_ref[...]
    for bi in range(x_ref.shape[0]):                         # small, static unroll
        acc = jnp.dot(w, x_ref[bi], preferred_element_type=jnp.float32)
        acc = acc * scale + shift
        o_ref[bi] = jnp.maximum(acc, 0.0).astype(o_ref.dtype)


def _pick_spatial_tile(hw_p, c, itemsize):
    """Largest lane-dense spatial tile whose double-buffered in+out tiles plus
    the resident weight/scale/shift fit the conservative VMEM budget."""
    fixed = c * c * itemsize + 2 * c * 4            # weight + scale/shift (f32)
    per_col = 2 * 2 * c * itemsize                  # 2 buffers x (in + out) per column
    t = (_VMEM_TILE_BUDGET - fixed) // per_col
    t = max(_LANE, (t // _LANE) * _LANE)
    return min(t, hw_p)


def motif_2_6_forward(x, conv_w, conv_b, bn_gamma, bn_beta, bn_mean, bn_var,
                      eps=1e-5):
    """Pallas implementation of motif_2_6.forward (conv1x1 -> BN(eval) -> ReLU)."""
    b, c, h, w = x.shape
    hw = h * w

    # Fold BN (eval mode, running stats) into a per-channel affine applied
    # after the conv:   y = scale*(W x + bias - mean) + beta
    #                     = (W x) * scale + (scale*(bias - mean) + beta)
    # TODO(synk): training-mode BatchNorm (batch statistics) is not implemented;
    #             this matches module.eval() semantics.
    scale = (bn_gamma / jnp.sqrt(bn_var + eps)).astype(jnp.float32)
    shift = (scale * (conv_b - bn_mean) + bn_beta).astype(jnp.float32)
    scale2 = scale.reshape(c, 1)
    shift2 = shift.reshape(c, 1)
    w2 = conv_w[:, :, 0, 0].astype(x.dtype)         # raw weight, no wrapper pre-scale

    # Channel-major slab (B, C, HW); pad the spatial axis up to a multiple of
    # 128 so the output stays lane-dense (unmasked stores).
    x3 = x.reshape(b, c, hw)
    hw_p = ((hw + _LANE - 1) // _LANE) * _LANE
    if hw_p != hw:
        x3 = jnp.pad(x3, ((0, 0), (0, 0), (0, hw_p - hw)))

    itemsize = x.dtype.itemsize
    io_bytes = 2 * b * c * hw_p * itemsize
    cost = pl.CostEstimate(
        flops=2 * b * hw_p * c * c,
        transcendentals=0,
        bytes_accessed=(io_bytes
                        + w2.size * w2.dtype.itemsize
                        + scale2.size * 4 + shift2.size * 4))

    if io_bytes <= _SINGLE_STEP_BYTES and b <= _MAX_UNROLL_BATCH:
        # Latency-bound regime: one grid step, whole working set resident.
        out3 = pl.pallas_call(
            _conv_bn_relu_single_kernel,
            out_shape=jax.ShapeDtypeStruct((b, c, hw_p), x.dtype),
            grid_spec=pl.GridSpec(
                grid=(1,),
                in_specs=[
                    pl.BlockSpec((c, c), lambda i: (0, 0)),
                    pl.BlockSpec((c, 1), lambda i: (0, 0)),
                    pl.BlockSpec((c, 1), lambda i: (0, 0)),
                    pl.BlockSpec((b, c, hw_p), lambda i: (0, 0, 0)),
                ],
                out_specs=pl.BlockSpec((b, c, hw_p), lambda i: (0, 0, 0)),
            ),
            compiler_params=pltpu.CompilerParams(
                dimension_semantics=("arbitrary",)),
            cost_estimate=cost,
        )(w2, scale2, shift2, x3)
    else:
        # HBM-bound regime: (batch, spatial) grid, both parallel; big
        # lane-dense tiles sized from the VMEM budget.
        t = _pick_spatial_tile(hw_p, c, itemsize)
        n_s = pl.cdiv(hw_p, t)
        out3 = pl.pallas_call(
            _conv_bn_relu_tile_kernel,
            out_shape=jax.ShapeDtypeStruct((b, c, hw_p), x.dtype),
            grid_spec=pl.GridSpec(
                grid=(b, n_s),
                in_specs=[
                    pl.BlockSpec((c, c), lambda bi, si: (0, 0)),
                    pl.BlockSpec((c, 1), lambda bi, si: (0, 0)),
                    pl.BlockSpec((c, 1), lambda bi, si: (0, 0)),
                    pl.BlockSpec((pl.Squeezed(), c, t),
                                 lambda bi, si: (bi, 0, si)),
                ],
                out_specs=pl.BlockSpec((pl.Squeezed(), c, t),
                                       lambda bi, si: (bi, 0, si)),
            ),
            compiler_params=pltpu.CompilerParams(
                dimension_semantics=("parallel", "parallel")),
            cost_estimate=cost,
        )(w2, scale2, shift2, x3)

    if hw_p != hw:
        out3 = out3[:, :, :hw]
    return out3.reshape(b, c, h, w)


def _reference(x, conv_w, conv_b, bn_gamma, bn_beta, bn_mean, bn_var, eps=1e-5):
    """Pure-JAX reference matching the PyTorch module (BN in eval mode)."""
    y = jnp.einsum('oi,bihw->bohw', conv_w[:, :, 0, 0], x,
                   precision=jax.lax.Precision.HIGHEST)
    y = y + conv_b[None, :, None, None]
    y = (y - bn_mean[None, :, None, None]) / jnp.sqrt(
        bn_var[None, :, None, None] + eps)
    y = y * bn_gamma[None, :, None, None] + bn_beta[None, :, None, None]
    return jnp.maximum(y, 0.0)


def _make_params(key, c):
    kw, kb, kg, kbt, km, kv = jax.random.split(key, 6)
    conv_w = 0.1 * jax.random.normal(kw, (c, c, 1, 1), dtype=jnp.float32)
    conv_b = 0.1 * jax.random.normal(kb, (c,), dtype=jnp.float32)
    bn_gamma = 1.0 + 0.1 * jax.random.normal(kg, (c,), dtype=jnp.float32)
    bn_beta = 0.1 * jax.random.normal(kbt, (c,), dtype=jnp.float32)
    bn_mean = 0.1 * jax.random.normal(km, (c,), dtype=jnp.float32)
    bn_var = 1.0 + 0.1 * jnp.abs(jax.random.normal(kv, (c,), dtype=jnp.float32))
    return conv_w, conv_b, bn_gamma, bn_beta, bn_mean, bn_var


def _check(x, params):
    y = motif_2_6_forward(x, *params)
    jax.block_until_ready(y)
    y_ref = _reference(x, *params)
    assert y.shape == x.shape and y.dtype == x.dtype
    max_err = float(jnp.max(jnp.abs(y - y_ref)))
    assert jnp.allclose(y, y_ref, rtol=1e-3, atol=1e-3), f"max_err={max_err}"


if __name__ == "__main__":
    key = jax.random.PRNGKey(0)
    kx1, kx2, kx3, kp = jax.random.split(key, 4)

    C = 16  # c0 = 16 in the original spec
    params = _make_params(kp, C)

    # 1) Benchmark shape — single-step (latency-bound) path.
    x1 = jax.random.normal(kx1, (2, C, 16, 16), dtype=jnp.float32)
    _check(x1, params)

    # 2) Larger spatial extent — tiled (B, spatial) grid path.
    x2 = jax.random.normal(kx2, (2, C, 128, 128), dtype=jnp.float32)
    _check(x2, params)

    # 3) Odd spatial size — exercises the lane-dense padding path.
    x3 = jax.random.normal(kx3, (2, C, 10, 10), dtype=jnp.float32)
    _check(x3, params)

    print("KERNEL_OK")
</pallas_src>

<mosaic_0001>
module attributes {stable_mosaic.version = 11 : i64} {
  func.func @_conv_bn_relu_single_kernel(%arg0: i32, %arg1: memref<16x16xf32, #tpu.memory_space<vmem>>, %arg2: memref<16x1xf32, #tpu.memory_space<vmem>>, %arg3: memref<16x1xf32, #tpu.memory_space<vmem>>, %arg4: memref<2x16x256xf32, #tpu.memory_space<vmem>>, %arg5: memref<2x16x256xf32, #tpu.memory_space<vmem>>) attributes {dimension_semantics = [#tpu.dimension_semantics<arbitrary>], iteration_bounds = array<i64: 1>, scalar_prefetch = 0 : i64, scratch_operands = 0 : i64, tpu.core_type = #tpu.core_type<tc>, window_params = [{pipeline_mode = #tpu.pipeline_mode<synchronous>, transform_indices = @transform_0, window_bounds = array<i64: 16, 16>}, {pipeline_mode = #tpu.pipeline_mode<synchronous>, transform_indices = @transform_1, window_bounds = array<i64: 16, 1>}, {pipeline_mode = #tpu.pipeline_mode<synchronous>, transform_indices = @transform_2, window_bounds = array<i64: 16, 1>}, {pipeline_mode = #tpu.pipeline_mode<synchronous>, transform_indices = @transform_3, window_bounds = array<i64: 2, 16, 256>}, {pipeline_mode = #tpu.pipeline_mode<synchronous>, transform_indices = @transform_4, window_bounds = array<i64: 2, 16, 256>}]} {
    %c0 = arith.constant 0 : index
    %c0_0 = arith.constant 0 : index
    %0 = vector.load %arg1[%c0, %c0_0] : memref<16x16xf32, #tpu.memory_space<vmem>>, vector<16x16xf32>
    %c0_1 = arith.constant 0 : index
    %c0_2 = arith.constant 0 : index
    %1 = vector.load %arg2[%c0_1, %c0_2] : memref<16x1xf32, #tpu.memory_space<vmem>>, vector<16x1xf32>
    %c0_3 = arith.constant 0 : index
    %c0_4 = arith.constant 0 : index
    %2 = vector.load %arg3[%c0_3, %c0_4] : memref<16x1xf32, #tpu.memory_space<vmem>>, vector<16x1xf32>
    %c0_5 = arith.constant 0 : index
    %c0_6 = arith.constant 0 : index
    %c0_7 = arith.constant 0 : index
    %3 = vector.load %arg4[%c0_5, %c0_6, %c0_7] : memref<2x16x256xf32, #tpu.memory_space<vmem>>, vector<1x16x256xf32>
    %4 = vector.shape_cast %3 : vector<1x16x256xf32> to vector<16x256xf32>
    %cst = arith.constant dense<0.000000e+00> : vector<16x256xf32>
    %5 = tpu.matmul %0, %4, %cst {dimension_numbers = #tpu.dot_dimension_numbers<[1], [0], [0], [1], [0, 0, 1, 1], [], []>} : vector<16x16xf32>, vector<16x256xf32>, vector<16x256xf32> -> vector<16x256xf32>
    %6 = vector.broadcast %1 : vector<16x1xf32> to vector<16x256xf32>
    %7 = arith.mulf %5, %6 : vector<16x256xf32>
    %8 = vector.broadcast %2 : vector<16x1xf32> to vector<16x256xf32>
    %9 = arith.addf %7, %8 : vector<16x256xf32>
    %cst_8 = arith.constant 0.000000e+00 : f32
    %10 = vector.broadcast %cst_8 : f32 to vector<16x256xf32>
    %11 = arith.maximumf %9, %10 : vector<16x256xf32>
    %c0_9 = arith.constant 0 : index
    %c0_10 = arith.constant 0 : index
    %c0_11 = arith.constant 0 : index
    %12 = vector.load %arg5[%c0_9, %c0_10, %c0_11] : memref<2x16x256xf32, #tpu.memory_space<vmem>>, vector<1x16x256xf32>
    %13 = vector.shape_cast %12 : vector<1x16x256xf32> to vector<16x256xf32>
    %14 = vector.shape_cast %11 : vector<16x256xf32> to vector<1x16x256xf32>
    tpu.vector_store %arg5[%c0_9, %c0_10, %c0_11], %14 {strides = array<i32>} : memref<2x16x256xf32, #tpu.memory_space<vmem>>, vector<1x16x256xf32>,
    %c1 = arith.constant 1 : index
    %c0_12 = arith.constant 0 : index
    %c0_13 = arith.constant 0 : index
    %15 = vector.load %arg4[%c1, %c0_12, %c0_13] : memref<2x16x256xf32, #tpu.memory_space<vmem>>, vector<1x16x256xf32>
    %16 = vector.shape_cast %15 : vector<1x16x256xf32> to vector<16x256xf32>
    %cst_14 = arith.constant dense<0.000000e+00> : vector<16x256xf32>
    %17 = tpu.matmul %0, %16, %cst_14 {dimension_numbers = #tpu.dot_dimension_numbers<[1], [0], [0], [1], [0, 0, 1, 1], [], []>} : vector<16x16xf32>, vector<16x256xf32>, vector<16x256xf32> -> vector<16x256xf32>
    %18 = vector.broadcast %1 : vector<16x1xf32> to vector<16x256xf32>
    %19 = arith.mulf %17, %18 : vector<16x256xf32>
    %20 = vector.broadcast %2 : vector<16x1xf32> to vector<16x256xf32>
    %21 = arith.addf %19, %20 : vector<16x256xf32>
    %cst_15 = arith.constant 0.000000e+00 : f32
    %22 = vector.broadcast %cst_15 : f32 to vector<16x256xf32>
    %23 = arith.maximumf %21, %22 : vector<16x256xf32>
    %c1_16 = arith.constant 1 : index
    %c0_17 = arith.constant 0 : index
    %c0_18 = arith.constant 0 : index
    %24 = vector.load %arg5[%c1_16, %c0_17, %c0_18] : memref<2x16x256xf32, #tpu.memory_space<vmem>>, vector<1x16x256xf32>
    %25 = vector.shape_cast %24 : vector<1x16x256xf32> to vector<16x256xf32>
    %26 = vector.shape_cast %23 : vector<16x256xf32> to vector<1x16x256xf32>
    tpu.vector_store %arg5[%c1_16, %c0_17, %c0_18], %26 {strides = array<i32>} : memref<2x16x256xf32, #tpu.memory_space<vmem>>, vector<1x16x256xf32>,
    return
  }
  func.func @transform_0(%arg0: i32) -> (i32, i32) {
    %c0_i32 = arith.constant 0 : i32
    %c0_i32_0 = arith.constant 0 : i32
    %c0_i32_1 = arith.constant 0 : i32
    return %c0_i32, %c0_i32_0 : i32, i32
  }
  func.func @transform_1(%arg0: i32) -> (i32, i32) {
    %c0_i32 = arith.constant 0 : i32
    %c0_i32_0 = arith.constant 0 : i32
    %c0_i32_1 = arith.constant 0 : i32
    return %c0_i32, %c0_i32_0 : i32, i32
  }
  func.func @transform_2(%arg0: i32) -> (i32, i32) {
    %c0_i32 = arith.constant 0 : i32
    %c0_i32_0 = arith.constant 0 : i32
    %c0_i32_1 = arith.constant 0 : i32
    return %c0_i32, %c0_i32_0 : i32, i32
  }
  func.func @transform_3(%arg0: i32) -> (i32, i32, i32) {
    %c0_i32 = arith.constant 0 : i32
    %c0_i32_0 = arith.constant 0 : i32
    %c0_i32_1 = arith.constant 0 : i32
    %c0_i32_2 = arith.constant 0 : i32
    return %c0_i32, %c0_i32_0, %c0_i32_1 : i32, i32, i32
  }
  func.func @transform_4(%arg0: i32) -> (i32, i32, i32) {
    %c0_i32 = arith.constant 0 : i32
    %c0_i32_0 = arith.constant 0 : i32
    %c0_i32_1 = arith.constant 0 : i32
    %c0_i32_2 = arith.constant 0 : i32
    return %c0_i32, %c0_i32_0, %c0_i32_1 : i32, i32, i32
  }
}

</mosaic_0001>

<llo_original>
// kernel: tpu_custom_call.1
$region0: #{tpu_custom_call.1}
  #allocation0 [shape = 'u32[]', space=smem, size = 0x4, offset = 0x4, fixed_abs, tag = 'smem constant byte address 0x4 - core index']
  #allocation1 [shape = 'u32[144,128]{1,0:T(1,128)}', space=vmem, size = 0x12000, scoped, tag = 'internal scratch']
  %s0 = inlined_call_operand.vmem [shape: f32[16,16], index: 0, kind: input, shape index: {}]
  %s1 = inlined_call_operand.vmem [shape: f32[16,1], index: 1, kind: input, shape index: {}]
  %s2 = inlined_call_operand.vmem [shape: f32[16,1], index: 2, kind: input, shape index: {}]
  %s3 = inlined_call_operand.hbm [shape: f32[2,16,256], index: 3, kind: input, shape index: {}]
  %s4 = inlined_call_operand.hbm [shape: f32[2,16,256], index: 4, kind: output, shape index: {}]
  %s5 = sld [smem:[#allocation0]]
  $region30: #{tpu_custom_call.1} parent=0
    _
  %s7 = ssub.s32 1, %s5
  %s8 = scalar_select 0, %s7, %s5
  $region1: #{tpu_custom_call.1} parent=0
    #allocation2 [shape = 'u8[32768]{0}', space=vmem, size = 0x8000, scoped, tag = 'input window, operand 3, single buffered']
    #allocation3 [shape = 's32[1]{0}', space=sflag, size = 0x4, scoped, tag = 'scoped memory for tpu_custom_call.1']
    #allocation4 [shape = 's32[1]{0}', space=sflag, size = 0x4, scoped, tag = 'scoped memory for tpu_custom_call.1']
    #allocation5 [shape = 'u8[32768]{0}', space=vmem, size = 0x8000, scoped, tag = 'output window, operand 0, single buffered']
    %9 = vsyncpa [#allocation3], 0
    %10 = vsyncpa [#allocation4], 0
    // Predicated region
    $region2: #{tpu_custom_call.1} parent=1 // pred_check
      _
    $region3: #{tpu_custom_call.1} parent=1 // pred_check_branch
      %12 = sbr.rel (0) target = $region5
    $region4: #{tpu_custom_call.1} parent=1 // pred_region
      _
    $region5: #{tpu_custom_call.1} parent=1 // pred_fallthru
      _
    // Predicated region
    $region6: #{tpu_custom_call.1} parent=1 // pred_check
      _
    $region7: #{tpu_custom_call.1} parent=1 // pred_check_branch
      %14 = sbr.rel (0) target = $region9
    $region8: #{tpu_custom_call.1} parent=1 // pred_region
      _
    $region9: #{tpu_custom_call.1} parent=1 // pred_fallthru
      _
    // Predicated region
    $region10: #{tpu_custom_call.1} parent=1 // pred_check
      _
    $region11: #{tpu_custom_call.1} parent=1 // pred_check_branch
      %16 = sbr.rel (0) target = $region13
    $region12: #{tpu_custom_call.1} parent=1 // pred_region
      _
    $region13: #{tpu_custom_call.1} parent=1 // pred_fallthru
      _
    // Predicated region
    $region14: #{tpu_custom_call.1} parent=1 // pred_check
      _
    $region15: #{tpu_custom_call.1} parent=1 // pred_check_branch
      %18 = sbr.rel (0) target = $region17
    $region16: #{tpu_custom_call.1} parent=1 // pred_region
      %s20 = ssub.s32 1024, 1024
      %21 = vsyncadd [#allocation3], %s20
      %s22 = sshll.u32 [#allocation2], 4
      %s23 = int_to_ptr.vmem [resolvable:$true] %s22
      %28 = dma.hbm_to_vmem [thread:$0]  %s3, 1024, %s23, [#allocation3], 256, 256, 16
    $region17: #{tpu_custom_call.1} parent=1 // pred_fallthru
      _
    // Predicated region
    $region18: #{tpu_custom_call.1} parent=1 // pred_check
      _
    $region19: #{tpu_custom_call.1} parent=1 // pred_check_branch
      %30 = sbr.rel (0) target = $region21
    $region20: #{tpu_custom_call.1} parent=1 // pred_region
      %31 = dma.done [#allocation3], 1024
    $region21: #{tpu_custom_call.1} parent=1 // pred_fallthru
      _
    %v32 = vld [vmem:[%s0] sm:$0xff]
    %v33 = vld [vmem:[%s0 + $0x8] sm:$0xff]
    %v34 = vld [vmem:[%s1] sm:$0xff]
    %v35 = vld [vmem:[%s1 + $0x8] sm:$0xff]
    %v36 = vld [vmem:[%s2] sm:$0xff]
    %v37 = vld [vmem:[%s2 + $0x8] sm:$0xff]
    %v38 = vld [vmem:[#allocation2] sm:$0xff]
    %v39 = vld [vmem:[#allocation2 + $0x8] sm:$0xff]
    %v40 = vld [vmem:[#allocation2 + $0x10] sm:$0xff]
    %v41 = vld [vmem:[#allocation2 + $0x18] sm:$0xff]
    %vm42 = vcmask 130048
    %v44 = vsel %vm42, %v32, 0
    %v47 = vsel %vm42, %v33, 0
    %49 = vmatprep.subr.mxu0 %v39
    %50 = vmatpush1.msra.mxu0 %v38
    %51 = vmatprep.subr.mxu0 %v41
    %52 = vmatpush1.msra.mxu0 %v40
    %53 = vmatprep.subr.mxu0 0.0
    %54 = vmatpush1.msra.mxu0 0.0
    %55 = vmatprep.subr.mxu0 0.0
    %56 = vmatpush1.msra.mxu0 0.0
    %57 = vmatprep.subr.mxu0 0.0
    %58 = vmatpush1.msra.mxu0 0.0
    %59 = vmatprep.subr.mxu0 0.0
    %60 = vmatpush1.msra.mxu0 0.0
    %61 = vmatprep.subr.mxu0 0.0
    %62 = vmatpush1.msra.mxu0 0.0
    %63 = vmatprep.subr.mxu0 0.0
    %64 = vmatpush1.msra.mxu0 0.0
    %65 = vmatprep.subr.mxu0 0.0
    %66 = vmatpush1.msra.mxu0 0.0
    %67 = vmatprep.subr.mxu0 0.0
    %68 = vmatpush1.msra.mxu0 0.0
    %69 = vmatprep.subr.mxu0 0.0
    %70 = vmatpush1.msra.mxu0 0.0
    %71 = vmatprep.subr.mxu0 0.0
    %72 = vmatpush1.msra.mxu0 0.0
    %73 = vmatprep.subr.mxu0 0.0
    %74 = vmatpush1.msra.mxu0 0.0
    %75 = vmatprep.subr.mxu0 0.0
    %76 = vmatpush1.msra.mxu0 0.0
    %77 = vmatprep.subr.mxu0 0.0
    %78 = vmatpush1.msra.mxu0 0.0
    %79 = vmatprep.subr.mxu0 0.0
    %80 = vmatpush1.msra.mxu0 0.0
    %81 = vmatprep.subr.mxu0 0.0
    %82 = vmatpush1.msra.mxu0 0.0
    %83 = vmatprep.subr.mxu0 0.0
    %84 = vmatpush1.msra.mxu0 0.0
    %85 = vmatprep.subr.mxu0 0.0
    %86 = vmatpush1.msra.mxu0 0.0
    %87 = vmatprep.subr.mxu0 0.0
    %88 = vmatpush1.msra.mxu0 0.0
    %89 = vmatprep.subr.mxu0 0.0
    %90 = vmatpush1.msra.mxu0 0.0
    %91 = vmatprep.subr.mxu0 0.0
    %92 = vmatpush1.msra.mxu0 0.0
    %93 = vmatprep.subr.mxu0 0.0
    %94 = vmatpush1.msra.mxu0 0.0
    %95 = vmatprep.subr.mxu0 0.0
    %96 = vmatpush1.msra.mxu0 0.0
    %97 = vmatprep.subr.mxu0 0.0
    %98 = vmatpush1.msra.mxu0 0.0
    %99 = vmatprep.subr.mxu0 0.0
    %100 = vmatpush1.msra.mxu0 0.0
    %101 = vmatprep.subr.mxu0 0.0
    %102 = vmatpush1.msra.mxu0 0.0
    %103 = vmatprep.subr.mxu0 0.0
    %104 = vmatpush1.msra.mxu0 0.0
    %105 = vmatprep.subr.mxu0 0.0
    %106 = vmatpush1.msra.mxu0 0.0
    %107 = vmatprep.subr.mxu0 0.0
    %108 = vmatpush1.msra.mxu0 0.0
    %109 = vmatprep.subr.mxu0 0.0
    %110 = vmatpush1.msra.mxu0 0.0
    %111 = vmatprep.subr.mxu0 0.0
    %112 = vmatpush1.msra.mxu0 0.0
    %113 = vmatprep.mubr.f32.mxu0 0.0
    %114 = vmatmul.mubr.f32.gmra.mrb[0].mxu0 %v44
    %v115 = vpop.f32.mrb[0].mxu0
    %v116 = vadd.f32 0.0, %v115
    %v117 = vpop.f32.mrb[0].mxu0
    %v118 = vadd.f32 0.0, %v117
    %119 = vmatprep.mubr.f32.mxu0 0.0
    %120 = vmatmul.mubr.f32.gmra.mrb[0].mxu0 %v47
    %v121 = vpop.f32.mrb[0].mxu0
    %v122 = vadd.f32 0.0, %v121
    %v123 = vpop.f32.mrb[0].mxu0
    %v124 = vadd.f32 0.0, %v123
    %125 = vdwg.mxu0
    %127 = vset.pattern.permute.xlu0 0
    %128 = vperm.xlu0 %127, %v34
    %v129 = vpop.permute.xlu0 %128
    %132 = vset.pattern.permute.xlu0 0
    %133 = vperm.xlu0 %132, %v35
    %v134 = vpop.permute.xlu0 %133
    %v136 = vmul.f32 %v116, %v129
    %v137 = vmul.f32 %v118, %v129
    %v138 = vmul.f32 %v122, %v134
    %v139 = vmul.f32 %v124, %v134
    %141 = vset.pattern.permute.xlu0 0
    %142 = vperm.xlu0 %141, %v36
    %v143 = vpop.permute.xlu0 %142
    %146 = vset.pattern.permute.xlu0 0
    %147 = vperm.xlu0 %146, %v37
    %v148 = vpop.permute.xlu0 %147
    %v150 = vadd.f32 %v136, %v143
    %v151 = vadd.f32 %v137, %v143
    %v152 = vadd.f32 %v138, %v148
    %v153 = vadd.f32 %v139, %v148
    %v154 = vmax.f32 %v150, 0.0
    %v155 = vmax.f32 %v151, 0.0
    %v156 = vmax.f32 %v152, 0.0
    %v157 = vmax.f32 %v153, 0.0
    %158 = vst [vmem:[#allocation5] sm:$0xff] %v154
    %159 = vst [vmem:[#allocation5 + $0x8] sm:$0xff] %v155
    %160 = vst [vmem:[#allocation5 + $0x10] sm:$0xff] %v156
    %161 = vst [vmem:[#allocation5 + $0x18] sm:$0xff] %v157
    %s162 = scalar_lea.vmem [#allocation2], 32
    %v163 = vld [vmem:[%s162] sm:$0xff]
    %v164 = vld [vmem:[%s162 + $0x8] sm:$0xff]
    %v165 = vld [vmem:[%s162 + $0x10] sm:$0xff]
    %v166 = vld [vmem:[%s162 + $0x18] sm:$0xff]
    %167 = vmatprep.subr.mxu0 %v164
    %168 = vmatpush1.msra.mxu0 %v163
    %169 = vmatprep.subr.mxu0 %v166
    %170 = vmatpush1.msra.mxu0 %v165
    %171 = vmatprep.subr.mxu0 0.0
    %172 = vmatpush1.msra.mxu0 0.0
    %173 = vmatprep.subr.mxu0 0.0
    %174 = vmatpush1.msra.mxu0 0.0
    %175 = vmatprep.subr.mxu0 0.0
    %176 = vmatpush1.msra.mxu0 0.0
    %177 = vmatprep.subr.mxu0 0.0
    %178 = vmatpush1.msra.mxu0 0.0
    %179 = vmatprep.subr.mxu0 0.0
    %180 = vmatpush1.msra.mxu0 0.0
    %181 = vmatprep.subr.mxu0 0.0
    %182 = vmatpush1.msra.mxu0 0.0
    %183 = vmatprep.subr.mxu0 0.0
    %184 = vmatpush1.msra.mxu0 0.0
    %185 = vmatprep.subr.mxu0 0.0
    %186 = vmatpush1.msra.mxu0 0.0
    %187 = vmatprep.subr.mxu0 0.0
    %188 = vmatpush1.msra.mxu0 0.0
    %189 = vmatprep.subr.mxu0 0.0
    %190 = vmatpush1.msra.mxu0 0.0
    %191 = vmatprep.subr.mxu0 0.0
    %192 = vmatpush1.msra.mxu0 0.0
    %193 = vmatprep.subr.mxu0 0.0
    %194 = vmatpush1.msra.mxu0 0.0
    %195 = vmatprep.subr.mxu0 0.0
    %196 = vmatpush1.msra.mxu0 0.0
    %197 = vmatprep.subr.mxu0 0.0
    %198 = vmatpush1.msra.mxu0 0.0
    %199 = vmatprep.subr.mxu0 0.0
    %200 = vmatpush1.msra.mxu0 0.0
    %201 = vmatprep.subr.mxu0 0.0
    %202 = vmatpush1.msra.mxu0 0.0
    %203 = vmatprep.subr.mxu0 0.0
    %204 = vmatpush1.msra.mxu0 0.0
    %205 = vmatprep.subr.mxu0 0.0
    %206 = vmatpush1.msra.mxu0 0.0
    %207 = vmatprep.subr.mxu0 0.0
    %208 = vmatpush1.msra.mxu0 0.0
    %209 = vmatprep.subr.mxu0 0.0
    %210 = vmatpush1.msra.mxu0 0.0
    %211 = vmatprep.subr.mxu0 0.0
    %212 = vmatpush1.msra.mxu0 0.0
    %213 = vmatprep.subr.mxu0 0.0
    %214 = vmatpush1.msra.mxu0 0.0
    %215 = vmatprep.subr.mxu0 0.0
    %216 = vmatpush1.msra.mxu0 0.0
    %217 = vmatprep.subr.mxu0 0.0
    %218 = vmatpush1.msra.mxu0 0.0
    %219 = vmatprep.subr.mxu0 0.0
    %220 = vmatpush1.msra.mxu0 0.0
    %221 = vmatprep.subr.mxu0 0.0
    %222 = vmatpush1.msra.mxu0 0.0
    %223 = vmatprep.subr.mxu0 0.0
    %224 = vmatpush1.msra.mxu0 0.0
    %225 = vmatprep.subr.mxu0 0.0
    %226 = vmatpush1.msra.mxu0 0.0
    %227 = vmatprep.subr.mxu0 0.0
    %228 = vmatpush1.msra.mxu0 0.0
    %229 = vmatprep.subr.mxu0 0.0
    %230 = vmatpush1.msra.mxu0 0.0
    %231 = vmatprep.mubr.f32.mxu0 0.0
    %232 = vmatmul.mubr.f32.gmra.mrb[0].mxu0 %v44
    %v233 = vpop.f32.mrb[0].mxu0
    %v234 = vadd.f32 0.0, %v233
    %v235 = vpop.f32.mrb[0].mxu0
    %v236 = vadd.f32 0.0, %v235
    %237 = vmatprep.mubr.f32.mxu0 0.0
    %238 = vmatmul.mubr.f32.gmra.mrb[0].mxu0 %v47
    %v239 = vpop.f32.mrb[0].mxu0
    %v240 = vadd.f32 0.0, %v239
    %v241 = vpop.f32.mrb[0].mxu0
    %v242 = vadd.f32 0.0, %v241
    %243 = vdwg.mxu0
    %v244 = vmul.f32 %v234, %v129
    %v245 = vmul.f32 %v236, %v129
    %v246 = vmul.f32 %v240, %v134
    %v247 = vmul.f32 %v242, %v134
    %v248 = vadd.f32 %v244, %v143
    %v249 = vadd.f32 %v245, %v143
    %v250 = vadd.f32 %v246, %v148
    %v251 = vadd.f32 %v247, %v148
    %v252 = vmax.f32 %v248, 0.0
    %v253 = vmax.f32 %v249, 0.0
    %v254 = vmax.f32 %v250, 0.0
    %v255 = vmax.f32 %v251, 0.0
    %s256 = scalar_lea.vmem [#allocation5], 32
    %257 = vst [vmem:[%s256] sm:$0xff] %v252
    %258 = vst [vmem:[%s256 + $0x8] sm:$0xff] %v253
    %259 = vst [vmem:[%s256 + $0x10] sm:$0xff] %v254
    %260 = vst [vmem:[%s256 + $0x18] sm:$0xff] %v255
    // Predicated region
    $region22: #{tpu_custom_call.1} parent=1 // pred_check
      _
    $region23: #{tpu_custom_call.1} parent=1 // pred_check_branch
      %262 = sbr.rel (0) target = $region25
    $region24: #{tpu_custom_call.1} parent=1 // pred_region
      %s264 = ssub.s32 1024, 1024
      %265 = vsyncadd [#allocation4], %s264
      %s266 = sshll.u32 [#allocation5], 4
      %s267 = int_to_ptr.vmem [resolvable:$true] %s266
      %272 = dma.vmem_to_hbm [thread:$0]  %s267, 1024, %s4, [#allocation4], 256, 256, 16
    $region25: #{tpu_custom_call.1} parent=1 // pred_fallthru
      _
    // Predicated region
    $region26: #{tpu_custom_call.1} parent=1 // pred_check
      _
    $region27: #{tpu_custom_call.1} parent=1 // pred_check_branch
      %274 = sbr.rel (0) target = $region29
    $region28: #{tpu_custom_call.1} parent=1 // pred_region
      %275 = dma.done [#allocation4], 1024
    $region29: #{tpu_custom_call.1} parent=1 // pred_fallthru
      _
    %276 = vsyncpa [#allocation3], 1
    %277 = vsyncpa [#allocation4], 1

</llo_original>
